<compile_context>
chip_gen: v7x
topology: tpu7x:2x2x1
jax: 0.10.0
libtpu: 0.0.40
codegen_flags: <defaults>
</compile_context>

<pallas_src>
import numpy as np
import jax
import jax.numpy as jnp
from jax import lax
from jax.experimental import pallas as pl
from jax.experimental.pallas import tpu as pltpu

PAD = 0  # Constants.PAD


# ----------------------------------------------------------------------------
# sinusoid position table (verbatim math from the torch helper, numpy only)
# ----------------------------------------------------------------------------
def get_sinusoid_encoding_table(n_position, d_hid, padding_idx=None):
    def cal_angle(position, hid_idx):
        return position / np.power(10000, 2 * (hid_idx // 2) / d_hid)

    def get_posi_angle_vec(position):
        return [cal_angle(position, hid_j) for hid_j in range(d_hid)]

    sinusoid_table = np.array(
        [get_posi_angle_vec(pos_i) for pos_i in range(n_position)]
    )
    sinusoid_table[:, 0::2] = np.sin(sinusoid_table[:, 0::2])
    sinusoid_table[:, 1::2] = np.cos(sinusoid_table[:, 1::2])
    if padding_idx is not None:
        sinusoid_table[padding_idx] = 0.0
    return jnp.asarray(sinusoid_table, dtype=jnp.float32)


# ----------------------------------------------------------------------------
# Kernel 1: embedding row gather (scalar-prefetch indexed BlockSpec) + pos enc
# ----------------------------------------------------------------------------
def _embed_kernel(ids_ref, emb_ref, pos_ref, out_ref):
    # The gather itself happens in the BlockSpec index_map (token id -> row).
    del ids_ref
    out_ref[...] = emb_ref[...] + pos_ref[...]


def embed_with_posenc(src_seq, emb_table, pos_table):
    B, T = src_seq.shape
    V, D = emb_table.shape
    n_pos = pos_table.shape[0]

    ids_flat = src_seq.reshape(B * T).astype(jnp.int32)
    emb3 = emb_table.reshape(V, 1, D)       # row-gatherable layout
    pos3 = pos_table.reshape(n_pos, 1, D)

    out3 = pl.pallas_call(
        _embed_kernel,
        out_shape=jax.ShapeDtypeStruct((B * T, 1, D), jnp.float32),
        grid_spec=pltpu.PrefetchScalarGridSpec(
            num_scalar_prefetch=1,
            grid=(B, T),
            in_specs=[
                # token embedding row, selected by the prefetched id
                pl.BlockSpec((1, 1, D), lambda b, t, ids: (ids[b * T + t], 0, 0)),
                # position row t is shared across the batch (no tiling in HBM)
                pl.BlockSpec((1, 1, D), lambda b, t, ids: (t, 0, 0)),
            ],
            out_specs=pl.BlockSpec((1, 1, D), lambda b, t, ids: (b * T + t, 0, 0)),
        ),
        compiler_params=pltpu.CompilerParams(
            dimension_semantics=("arbitrary", "arbitrary"),
            vmem_limit_bytes=8 * 1024 * 1024,
        ),
    )(ids_flat, emb3, pos3)
    return out3.reshape(B, T, D)


# ----------------------------------------------------------------------------
# Kernel 2: fused Mamba2 layer stack, grid = (batch, layer)
# ----------------------------------------------------------------------------
def _silu(x):
    return x * (1.0 / (1.0 + jnp.exp(-x)))


def _softplus(x):
    # overflow-safe softplus
    safe = jnp.minimum(x, 20.0)
    return jnp.where(x > 20.0, x, jnp.log(1.0 + jnp.exp(safe)))


def _mamba2_stack_kernel(x_ref, wi_ref, convw_ref, convb_ref, hp_ref,
                         normw_ref, wo_ref, out_ref):
    # layout per grid step (b, layer):
    #   x/out blocks (1, T, d_model) f32 ; out block is resident across layers
    #   wi    : (1, d_model, 2*d_inner + 2*d_state + nheads)  bf16  [in_proj.weight.T]
    #   convw : (1, d_conv, conv_dim) f32, conv_dim = d_inner + 2*d_state
    #   convb : (1, 1, conv_dim) f32
    #   hp    : (1, 3, nheads) f32, rows = [dt_bias, A_log, D]
    #   normw : (1, 1, d_inner) f32
    #   wo    : (1, d_inner, d_model) bf16                    [out_proj.weight.T]
    layer = pl.program_id(1)

    # first layer: load the embedded residual stream into the resident block
    @pl.when(layer == 0)
    def _():
        out_ref[...] = x_ref[...]

    h = out_ref[0]                                       # (T, d_model) f32
    T, d_model = h.shape
    d_inner = normw_ref.shape[2]
    d_conv = convw_ref.shape[1]
    conv_dim = convw_ref.shape[2]
    d_state = (conv_dim - d_inner) // 2
    nheads = hp_ref.shape[2]
    headdim = d_inner // nheads

    # ---- input projection (bf16 MXU operands, f32 accumulation) ------------
    zxbcdt = jnp.dot(h.astype(jnp.bfloat16), wi_ref[0],
                     preferred_element_type=jnp.float32)         # (T, d_in_proj)
    z = zxbcdt[:, :d_inner]                                      # (T, d_inner)
    xBC = zxbcdt[:, d_inner:d_inner + conv_dim]                  # (T, conv_dim)
    dt_raw = zxbcdt[:, d_inner + conv_dim:]                      # (T, nheads)

    # ---- depthwise causal conv1d (taps = d_conv) via XLU rolls + SiLU -------
    convw = convw_ref[0]                                         # (d_conv, conv_dim)
    row = lax.broadcasted_iota(jnp.int32, (T, conv_dim), 0)
    acc = xBC * convw[d_conv - 1:d_conv, :]
    for k in range(1, d_conv):                                   # static unroll
        shifted = pltpu.roll(xBC, shift=k, axis=0)               # x[t - k]
        shifted = jnp.where(row >= k, shifted, 0.0)              # zero wrap-around
        acc = acc + shifted * convw[d_conv - 1 - k:d_conv - k, :]
    xBC_act = _silu(acc + convb_ref[0])                          # (T, conv_dim)

    x_ssm = xBC_act[:, :d_inner]                                 # (T, d_inner)
    Bmat = xBC_act[:, d_inner:d_inner + d_state]                 # (T, d_state)
    Cmat = xBC_act[:, d_inner + d_state:]                        # (T, d_state)

    # ---- SSD: stable segment-sum decay, heads batched in one dot_general ----
    hp = hp_ref[0]                                               # (3, nheads)
    dt_bias = hp[0:1, :]
    A_row = -jnp.exp(hp[1:2, :])                                 # (1, H), A < 0
    D_row = hp[2:3, :]

    dt = _softplus(dt_raw + dt_bias)                             # (T, H)
    dtA = dt * A_row                                             # (T, H), <= 0

    t_i = lax.broadcasted_iota(jnp.int32, (T, T), 0)
    s_i = lax.broadcasted_iota(jnp.int32, (T, T), 1)
    causal = s_i <= t_i
    tri = causal.astype(jnp.float32)                             # (T, T)

    # inclusive cumsum over time, produced directly in (H, T) layout on the MXU
    cumA_h = lax.dot_general(dtA, tri, (((0,), (1,)), ((), ())),
                             preferred_element_type=jnp.float32)  # (H, T)

    # C_t . B_s scores, shared across heads (ngroups = 1)
    CB = lax.dot_general(Cmat.astype(jnp.bfloat16), Bmat.astype(jnp.bfloat16),
                         (((1,), (1,)), ((), ())),
                         preferred_element_type=jnp.float32)      # (T, T)

    # bounded decay: exp(cumA_t - cumA_s) <= 1 inside the causal mask
    diff = cumA_h[:, :, None] - cumA_h[:, None, :]                # (H, T, T)
    L = jnp.exp(jnp.where(causal[None, :, :], diff, -1e30))       # (H, T, T)
    G = L * CB[None, :, :]                                        # (H, T, T)

    x_hp = x_ssm.reshape(T, nheads, headdim)                      # (T, H, P)
    U = x_hp * dt[:, :, None]                                     # (T, H, P)
    # contract time, batch over heads: (H,T,T) x (T,H,P) -> (H,T,P)
    Yh = lax.dot_general(G.astype(jnp.bfloat16), U.astype(jnp.bfloat16),
                         (((2,), (0,)), ((0,), (1,))),
                         preferred_element_type=jnp.float32)      # (H, T, P)
    y = jnp.transpose(Yh, (1, 0, 2)) + D_row.reshape(1, nheads, 1) * x_hp
    y = y.reshape(T, d_inner)                                     # (T, d_inner)

    # ---- gated RMSNorm (norm(y * silu(z)) * weight) --------------------------
    yz = y * _silu(z)
    var = jnp.mean(yz * yz, axis=-1, keepdims=True)
    yn = yz * lax.rsqrt(var + 1e-5) * normw_ref[0]

    # ---- output projection + residual ----------------------------------------
    out = jnp.dot(yn.astype(jnp.bfloat16), wo_ref[0],
                  preferred_element_type=jnp.float32)
    out_ref[0] = h + out


def _layer_vmem_bytes(T, d_model, d_in_proj, conv_dim, d_inner, nheads):
    f32 = 4
    blocks = (f32 * (2 * T * d_model + 3 * conv_dim + 3 * nheads + d_inner)
              + 2 * (d_model * d_in_proj + d_inner * d_model))   # bf16 weights
    temps = f32 * (T * d_in_proj + 3 * T * conv_dim
                   + 3 * nheads * T * T + 2 * T * T + 8 * T * d_inner)
    est = 2 * blocks + temps + (4 << 20)                          # 2x double-buffer + slack
    return int(min(max(est, 8 << 20), 48 << 20))                  # safe on v7x (64 MiB VMEM)


def mamba2_stack(x, stacked_params):
    wi, convw, convb, hp, normw, wo = stacked_params
    B, T, d_model = x.shape
    n_layers = wi.shape[0]
    d_in_proj = wi.shape[2]
    conv_dim = convw.shape[2]
    d_inner = normw.shape[2]
    nheads = hp.shape[2]

    vmem_bytes = _layer_vmem_bytes(T, d_model, d_in_proj, conv_dim, d_inner, nheads)

    return pl.pallas_call(
        _mamba2_stack_kernel,
        out_shape=jax.ShapeDtypeStruct((B, T, d_model), jnp.float32),
        grid_spec=pltpu.PrefetchScalarGridSpec(
            num_scalar_prefetch=0,
            grid=(B, n_layers),               # layer is the fastest axis
            in_specs=[
                pl.BlockSpec((1, T, d_model), lambda b, l: (b, 0, 0)),
                pl.BlockSpec((1,) + wi.shape[1:], lambda b, l: (l, 0, 0)),
                pl.BlockSpec((1,) + convw.shape[1:], lambda b, l: (l, 0, 0)),
                pl.BlockSpec((1,) + convb.shape[1:], lambda b, l: (l, 0, 0)),
                pl.BlockSpec((1,) + hp.shape[1:], lambda b, l: (l, 0, 0)),
                pl.BlockSpec((1,) + normw.shape[1:], lambda b, l: (l, 0, 0)),
                pl.BlockSpec((1,) + wo.shape[1:], lambda b, l: (l, 0, 0)),
            ],
            # same block index across the layer axis -> residual stream stays
            # resident in VMEM, written back to HBM only when b changes
            out_specs=pl.BlockSpec((1, T, d_model), lambda b, l: (b, 0, 0)),
        ),
        compiler_params=pltpu.CompilerParams(
            dimension_semantics=("parallel", "arbitrary"),
            vmem_limit_bytes=vmem_bytes,
        ),
    )(x, wi, convw, convb, hp, normw, wo)


# ----------------------------------------------------------------------------
# Parameter init (deterministic, synthetic) and the Encoder forward pass
# ----------------------------------------------------------------------------
def init_encoder_params(key, *, n_src_vocab, len_max_seq, d_model, d_state,
                        d_conv, n_layers, headdim):
    expand = 2
    d_inner = expand * d_model
    nheads = d_inner // headdim
    conv_dim = d_inner + 2 * d_state
    d_in_proj = 2 * d_inner + 2 * d_state + nheads

    keys = jax.random.split(key, 1 + n_layers)
    emb = 0.02 * jax.random.normal(keys[0], (n_src_vocab, d_model), jnp.float32)
    emb = emb.at[PAD].set(0.0)                              # nn.Embedding padding_idx
    pos_table = get_sinusoid_encoding_table(len_max_seq + 1, d_model)

    wi_l, convw_l, convb_l, hp_l, normw_l, wo_l = [], [], [], [], [], []
    for l in range(n_layers):
        k = jax.random.split(keys[1 + l], 3)
        wi = jax.random.normal(k[0], (d_model, d_in_proj), jnp.float32) / np.sqrt(d_model)
        convw = 0.2 * jax.random.normal(k[1], (d_conv, conv_dim), jnp.float32)
        convb = jnp.zeros((1, conv_dim), jnp.float32)
        dt_bias = jnp.full((1, nheads), float(np.log(np.expm1(0.05))), jnp.float32)
        a_log = jnp.log(jnp.arange(1, nheads + 1, dtype=jnp.float32))[None, :]
        d_vals = jnp.ones((1, nheads), jnp.float32)
        hp = jnp.concatenate([dt_bias, a_log, d_vals], axis=0)      # (3, nheads)
        normw = jnp.ones((1, d_inner), jnp.float32)
        wo = jax.random.normal(k[2], (d_inner, d_model), jnp.float32) / np.sqrt(d_inner)

        wi_l.append(wi.astype(jnp.bfloat16))                 # bf16 MXU operands
        convw_l.append(convw)
        convb_l.append(convb)
        hp_l.append(hp)
        normw_l.append(normw)
        wo_l.append(wo.astype(jnp.bfloat16))

    stacked = (jnp.stack(wi_l), jnp.stack(convw_l), jnp.stack(convb_l),
               jnp.stack(hp_l), jnp.stack(normw_l), jnp.stack(wo_l))
    return emb, pos_table, stacked


def encoder_forward(src_seq, mask, emb, pos_table, stacked_layers):
    B, T = src_seq.shape
    # slf_attn_mask is built but (as in the torch forward) never affects the output
    _slf_attn_mask = jnp.broadcast_to(mask[:, None, :], (B, T, T))

    enc = embed_with_posenc(src_seq, emb, pos_table)         # (B, T, d_model)
    enc = mamba2_stack(enc, stacked_layers)                  # fused layer stack
    return enc


if __name__ == "__main__":
    key = jax.random.PRNGKey(0)
    k_param, k_ids = jax.random.split(key)

    # small, self-consistent hyper-params
    batch, seq_len = 2, 8
    n_src_vocab = 40          # len(symbols) + 1
    len_max_seq = 32          # hp.max_seq_len
    d_model = 32              # hp.encoder_hidden
    d_state = 128
    d_conv = 3
    n_layers = 2              # hp.encoder_layer
    headdim = d_model // 2

    emb, pos_table, stacked = init_encoder_params(
        k_param, n_src_vocab=n_src_vocab, len_max_seq=len_max_seq,
        d_model=d_model, d_state=d_state, d_conv=d_conv,
        n_layers=n_layers, headdim=headdim)

    src_seq = jax.random.randint(k_ids, (batch, seq_len), 1, n_src_vocab,
                                 dtype=jnp.int32)
    mask = jnp.zeros((batch, seq_len), dtype=jnp.bool_)      # padding mask

    out = encoder_forward(src_seq, mask, emb, pos_table, stacked)
    out = jax.block_until_ready(out)

    assert out.shape == (batch, seq_len, d_model)
    assert bool(jnp.all(jnp.isfinite(out)))
    print("KERNEL_OK")
</pallas_src>

<mosaic_0001>
module attributes {stable_mosaic.version = 11 : i64} {
  func.func @_embed_kernel(%arg0: i32, %arg1: i32, %arg2: memref<16xi32, #tpu.memory_space<smem>>, %arg3: memref<1x1x32xf32, #tpu.memory_space<vmem>>, %arg4: memref<1x1x32xf32, #tpu.memory_space<vmem>>, %arg5: memref<1x1x32xf32, #tpu.memory_space<vmem>>) attributes {dimension_semantics = [#tpu.dimension_semantics<arbitrary>, #tpu.dimension_semantics<arbitrary>], iteration_bounds = array<i64: 2, 8>, scalar_prefetch = 1 : i64, scratch_operands = 0 : i64, tpu.core_type = #tpu.core_type<tc>, window_params = [{transform_indices = @transform_0, window_bounds = array<i64: 1, 1, 32>}, {transform_indices = @transform_1, window_bounds = array<i64: 1, 1, 32>}, {transform_indices = @transform_2, window_bounds = array<i64: 1, 1, 32>}]} {
    %c0 = arith.constant 0 : index
    %c0_0 = arith.constant 0 : index
    %c0_1 = arith.constant 0 : index
    %0 = vector.load %arg3[%c0, %c0_0, %c0_1] : memref<1x1x32xf32, #tpu.memory_space<vmem>>, vector<1x1x32xf32>
    %c0_2 = arith.constant 0 : index
    %c0_3 = arith.constant 0 : index
    %c0_4 = arith.constant 0 : index
    %1 = vector.load %arg4[%c0_2, %c0_3, %c0_4] : memref<1x1x32xf32, #tpu.memory_space<vmem>>, vector<1x1x32xf32>
    %2 = arith.addf %0, %1 : vector<1x1x32xf32>
    %c0_5 = arith.constant 0 : index
    %c0_6 = arith.constant 0 : index
    %c0_7 = arith.constant 0 : index
    %3 = vector.load %arg5[%c0_5, %c0_6, %c0_7] : memref<1x1x32xf32, #tpu.memory_space<vmem>>, vector<1x1x32xf32>
    tpu.vector_store %arg5[%c0_5, %c0_6, %c0_7], %2 {strides = array<i32>} : memref<1x1x32xf32, #tpu.memory_space<vmem>>, vector<1x1x32xf32>,
    return
  }
  func.func @transform_0(%arg0: i32, %arg1: i32, %arg2: memref<16xi32, #tpu.memory_space<smem>>) -> (i32, i32, i32) {
    %c8_i32 = arith.constant 8 : i32
    %0 = arith.muli %arg0, %c8_i32 : i32
    %1 = arith.addi %0, %arg1 : i32
    %2 = arith.index_cast %1 : i32 to index
    %3 = memref.load %arg2[%2] : memref<16xi32, #tpu.memory_space<smem>>
    %c0_i32 = arith.constant 0 : i32
    %c0_i32_0 = arith.constant 0 : i32
    %c0_i32_1 = arith.constant 0 : i32
    return %3, %c0_i32, %c0_i32_0 : i32, i32, i32
  }
  func.func @transform_1(%arg0: i32, %arg1: i32, %arg2: memref<16xi32, #tpu.memory_space<smem>>) -> (i32, i32, i32) {
    %c0_i32 = arith.constant 0 : i32
    %c0_i32_0 = arith.constant 0 : i32
    %c0_i32_1 = arith.constant 0 : i32
    return %arg1, %c0_i32, %c0_i32_0 : i32, i32, i32
  }
  func.func @transform_2(%arg0: i32, %arg1: i32, %arg2: memref<16xi32, #tpu.memory_space<smem>>) -> (i32, i32, i32) {
    %c8_i32 = arith.constant 8 : i32
    %0 = arith.muli %arg0, %c8_i32 : i32
    %1 = arith.addi %0, %arg1 : i32
    %c0_i32 = arith.constant 0 : i32
    %c0_i32_0 = arith.constant 0 : i32
    %c0_i32_1 = arith.constant 0 : i32
    return %1, %c0_i32, %c0_i32_0 : i32, i32, i32
  }
}

</mosaic_0001>

<llo_original>
// kernel: tpu_custom_call.1
$region0: #{tpu_custom_call.1}
  #allocation0 [shape = 'u32[]', space=smem, size = 0x4, offset = 0x4, fixed_abs, tag = 'smem constant byte address 0x4 - core index']
  #allocation1 [shape = 'u32[144,128]{1,0:T(1,128)}', space=vmem, size = 0x12000, scoped, tag = 'internal scratch']
  #allocation2 [shape = 's32[1]{0}', space=sflag, size = 0x4, scoped, tag = 'scoped memory for tpu_custom_call.1']
  #allocation3 [shape = 'u8[512]{0}', space=smem, size = 0x200, scoped, tag = 'prefetched SMEM operand 0']
  %s0 = inlined_call_operand.vmem [shape: s32[16], index: 0, kind: input, shape index: {}]
  %s1 = inlined_call_operand.vmem [shape: f32[40,1,32], index: 1, kind: input, shape index: {}]
  %s2 = inlined_call_operand.vmem [shape: f32[33,1,32], index: 2, kind: input, shape index: {}]
  %s3 = inlined_call_operand.hbm [shape: f32[16,1,32], index: 3, kind: output, shape index: {}]
  %s4 = sld [smem:[#allocation0]]
  $region41: #{tpu_custom_call.1} parent=0
    _
  %s6 = ssub.s32 1, %s4
  %s7 = scalar_select 0, %s6, %s4
  %s8 = sshll.u32 %s0, 4
  %s9 = int_to_ptr.vmem [resolvable:$true] %s8
  %11 = dma.vmem_to_smem %s9, 16, [#allocation3], [#allocation2]
  %12 = dma.done [#allocation2], 16
  %13 = sfence
  $region1: #{tpu_custom_call.1} parent=0
    #allocation4 [shape = 'u8[1024]{0}', space=vmem, size = 0x400, scoped, tag = 'output window, operand 0']
    #allocation5 [shape = 's32[2]{0}', space=sflag, size = 0x8, scoped, tag = 'scoped memory for tpu_custom_call.1']
    %14 = vsyncpa [#allocation5], 0
    %s15 = scalar_lea.sflag [#allocation5], 1
    %16 = vsyncpa %s15, 0
    loop: start=0, step=1, limit=18
    $region2: #{tpu_custom_call.1} parent=1 // loop_pre_header
      _
    $region3: #{tpu_custom_call.1} parent=1 // loop_header
      %s18 = sphi 0, %s22
      %p19 = scmp.ge.s32.totalorder %s18, 18
      %s25 = sphi 0, %s37
      %s26 = sphi 0, %s33
      %s27 = sphi 0, %s25
      %s28 = sphi 0, %s26
      %s29 = sphi 0, %s27
      %s30 = sphi 0, %s28
      %s46 = sphi 0, %s48
      %s49 = sphi 0, %s46
      %s50 = sphi 0, %s49
      %s66 = sphi 0, %s50
      %s72 = sphi 0, %s74
      %s75 = sphi 0, %s72
      %s76 = sphi 0, %s75
      %s92 = sphi 0, %s76
      %s102 = sphi 0, %s104
      %s105 = sphi 0, %s102
      %s106 = sphi 0, %s105
      %s122 = sphi 0, %s106
    $region4: #{tpu_custom_call.1} parent=1 // loop_header_branch
      %21 = sbr.rel (%p19) target = $region8
    $region5: #{tpu_custom_call.1} parent=1 // loop_body
      %s23 = ssub.s32 %s18, 1
      %s24 = ssub.s32 %s18, 2
      %s31 = sadd.s32 1, %s26
      %p32 = scmp.ge.s32.totalorder %s31, 8
      %s33 = scalar_select %p32, 0, %s31
      %s34 = sadd.s32 1, %s25
      %s35 = scalar_select %p32, %s34, %s25
      %p36 = scmp.ge.s32.totalorder %s35, 2
      %s37 = scalar_select %p36, 0, %s35
      %s38 = smul.u32 %s25, 8
      %s39 = sadd.s32 %s38, %s26
      %s40 = sld [smem:[#allocation3 + %s39]]
      %s41 = smul.u32 %s37, 8
      %s42 = sadd.s32 %s41, %s33
      %s43 = sld [smem:[#allocation3 + %s42]]
      %s44 = ssub.s32 %s40, %s43
      %p45 = scmp.eq.s32.totalorder %s44, 0
      %s47 = sadd.s32 %s46, 1
      %s48 = scalar_select %p45, %s46, %s47
      %p51 = pneg %p45
      %p52 = scmp.eq.s32.totalorder %s18, 15
      %p53 = por %p51, %p52
      %p54 = scmp.ne.s32.totalorder %s46, %s49
      %p55 = scmp.eq.s32.totalorder %s18, 0
      %p56 = por %p54, %p55
      %p57 = scmp.ne.s32.totalorder %s46, %s49
      %p58 = scmp.eq.s32.totalorder %s23, 15
      %p59 = por %p57, %p58
      %p60 = scmp.ne.s32.totalorder %s49, %s50
      %p61 = scmp.eq.s32.totalorder %s23, 0
      %p62 = por %p60, %p61
      %p63 = scmp.ne.s32.totalorder %s49, %s50
      %p64 = scmp.eq.s32.totalorder %s24, 15
      %p65 = por %p63, %p64
      %p67 = scmp.ne.s32.totalorder %s50, %s66
      %p68 = scmp.eq.s32.totalorder %s24, 0
      %p69 = por %p67, %p68
      %s70 = ssub.s32 %s26, %s33
      %p71 = scmp.eq.s32.totalorder %s70, 0
      %s73 = sadd.s32 %s72, 1
      %s74 = scalar_select %p71, %s72, %s73
      %p77 = pneg %p71
      %p78 = scmp.eq.s32.totalorder %s18, 15
      %p79 = por %p77, %p78
      %p80 = scmp.ne.s32.totalorder %s72, %s75
      %p81 = scmp.eq.s32.totalorder %s18, 0
      %p82 = por %p80, %p81
      %p83 = scmp.ne.s32.totalorder %s72, %s75
      %p84 = scmp.eq.s32.totalorder %s23, 15
      %p85 = por %p83, %p84
      %p86 = scmp.ne.s32.totalorder %s75, %s76
      %p87 = scmp.eq.s32.totalorder %s23, 0
      %p88 = por %p86, %p87
      %p89 = scmp.ne.s32.totalorder %s75, %s76
      %p90 = scmp.eq.s32.totalorder %s24, 15
      %p91 = por %p89, %p90
      %p93 = scmp.ne.s32.totalorder %s76, %s92
      %p94 = scmp.eq.s32.totalorder %s24, 0
      %p95 = por %p93, %p94
      %s96 = smul.u32 %s25, 8
      %s97 = sadd.s32 %s96, %s26
      %s98 = smul.u32 %s37, 8
      %s99 = sadd.s32 %s98, %s33
      %s100 = ssub.s32 %s97, %s99
      %p101 = scmp.eq.s32.totalorder %s100, 0
      %s103 = sadd.s32 %s102, 1
      %s104 = scalar_select %p101, %s102, %s103
      %p107 = pneg %p101
      %p108 = scmp.eq.s32.totalorder %s18, 15
      %p109 = por %p107, %p108
      %p110 = scmp.ne.s32.totalorder %s102, %s105
      %p111 = scmp.eq.s32.totalorder %s18, 0
      %p112 = por %p110, %p111
      %p113 = scmp.ne.s32.totalorder %s102, %s105
      %p114 = scmp.eq.s32.totalorder %s23, 15
      %p115 = por %p113, %p114
      %p116 = scmp.ne.s32.totalorder %s105, %s106
      %p117 = scmp.eq.s32.totalorder %s23, 0
      %p118 = por %p116, %p117
      %p119 = scmp.ne.s32.totalorder %s105, %s106
      %p120 = scmp.eq.s32.totalorder %s24, 15
      %p121 = por %p119, %p120
      %p123 = scmp.ne.s32.totalorder %s106, %s122
      %p124 = scmp.eq.s32.totalorder %s24, 0
      %p125 = por %p123, %p124
      %p126 = scmp.le.s32.totalorder 1, %s18
      %p127 = scmp.lt.s32.totalorder %s18, 17
      %p128 = pnand %p126, %p127
      %p129 = pneg %p128
      // Predicated region
      $region9: #{tpu_custom_call.1} parent=5 // pred_check
        _
      $region10: #{tpu_custom_call.1} parent=5 // pred_check_branch
        %131 = sbr.rel (%p128) target = $region12
      $region11: #{tpu_custom_call.1} parent=5 // pred_region
        %s132 = ssub.s32 %s18, 1
      $region12: #{tpu_custom_call.1} parent=5 // pred_fallthru
        _
      %p133 = scmp.lt.s32.totalorder %s18, 16
      // Predicated region
      $region13: #{tpu_custom_call.1} parent=5 // pred_check
        %p134 = pneg %p133
      $region14: #{tpu_custom_call.1} parent=5 // pred_check_branch
        %136 = sbr.rel (%p134) target = $region16
      $region15: #{tpu_custom_call.1} parent=5 // pred_region
        // Predicated region
        $region17: #{tpu_custom_call.1} parent=15 // pred_check
          %p137 = pneg %p56
        $region18: #{tpu_custom_call.1} parent=15 // pred_check_branch
          %139 = sbr.rel (%p137) target = $region20
        $region19: #{tpu_custom_call.1} parent=15 // pred_region
          %s140 = smul.u32 %s25, 8
          %s141 = sadd.s32 %s140, %s26
          %s142 = sld [smem:[#allocation3 + %s141]]
          %p143 = scmp.lt.s32.totalorder %s142, 39
          %s144 = scalar_select %p143, %s142, 39
          %s145 = scalar_lea.vmem %s1, %s144
          %s146 = smul.u32 %s25, 8
          %s147 = sadd.s32 %s146, %s26
          %s148 = sld [smem:[#allocation3 + %s147]]
        $region20: #{tpu_custom_call.1} parent=15 // pred_fallthru
          _
        // Predicated region
        $region21: #{tpu_custom_call.1} parent=15 // pred_check
          %p149 = pneg %p82
        $region22: #{tpu_custom_call.1} parent=15 // pred_check_branch
          %151 = sbr.rel (%p149) target = $region24
        $region23: #{tpu_custom_call.1} parent=15 // pred_region
          %p152 = scmp.lt.s32.totalorder %s26, 32
          %s153 = scalar_select %p152, %s26, 32
          %s154 = scalar_lea.vmem %s2, %s153
        $region24: #{tpu_custom_call.1} parent=15 // pred_fallthru
          _
      $region16: #{tpu_custom_call.1} parent=5 // pred_fallthru
        _
      %p155 = scmp.le.s32.totalorder 1, %s18
      %p156 = scmp.lt.s32.totalorder %s18, 17
      %p157 = pnand %p155, %p156
      %p158 = pneg %p157
      // Predicated region
      $region25: #{tpu_custom_call.1} parent=5 // pred_check
        _
      $region26: #{tpu_custom_call.1} parent=5 // pred_check_branch
        %160 = sbr.rel (%p157) target = $region28
      $region27: #{tpu_custom_call.1} parent=5 // pred_region
        %s161 = ssub.s32 %s18, 1
        %s162 = smul.u32 %s27, 8
        %s163 = sadd.s32 %s162, %s28
        %s164 = sld [smem:[#allocation3 + %s163]]
        %p165 = scmp.lt.s32.totalorder %s164, 39
        %s166 = scalar_select %p165, %s164, 39
        %s167 = scalar_lea.vmem %s1, %s166
        %p168 = pneg %p62
        %p169 = pneg %p59
        %p170 = scmp.lt.s32.totalorder %s28, 32
        %s171 = scalar_select %p170, %s28, 32
        %s172 = scalar_lea.vmem %s2, %s171
        %p173 = pneg %p88
        %p174 = pneg %p85
        %p175 = pneg %p118
        %p176 = pneg %p115
        %s177 = sand.u32 %s105, 1
        %s178 = scalar_lea.sflag [#allocation5], %s177
        %s179 = sand.u32 %s105, 1
        %s180 = scalar_lea.vmem [#allocation4], %s179
        %s181 = smul.u32 %s27, 8
        %s182 = sadd.s32 %s181, %s28
        %s183 = sld [smem:[#allocation3 + %s182]]
        %p184 = scmp.lt.s32.totalorder %s183, 39
        %s185 = scalar_select %p184, %s183, 39
        %s186 = scalar_lea.vmem %s1, %s185
        %s187 = smul.u32 %s27, 8
        %s188 = sadd.s32 %s187, %s28
        %s189 = sld [smem:[#allocation3 + %s188]]
        %p190 = scmp.lt.s32.totalorder %s28, 32
        %s191 = scalar_select %p190, %s28, 32
        %s192 = scalar_lea.vmem %s2, %s191
        %s193 = smul.u32 %s27, 8
        %s194 = sadd.s32 %s193, %s28
        %v195 = vld [vmem:[%s186] sm:$0x1]
        %v196 = vld [vmem:[%s192] sm:$0x1]
        %v197 = vadd.f32 %v195, %v196
        %vm198 = vcmask 253952
        %199 = vst.msk [vmem:[%s180] sm:$0x1] %vm198, %v197
        %s200 = sand.u32 %s105, 1
        %s201 = scalar_lea.sflag [#allocation5], %s200
        %s202 = sand.u32 %s105, 1
        %s203 = scalar_lea.vmem [#allocation4], %s202
        // Predicated region
        $region29: #{tpu_custom_call.1} parent=27 // pred_check
          %p204 = pneg %p115
        $region30: #{tpu_custom_call.1} parent=27 // pred_check_branch
          %206 = sbr.rel (%p204) target = $region32
        $region31: #{tpu_custom_call.1} parent=27 // pred_region
          %s207 = smul.u32 %s27, 8
          %s208 = sadd.s32 %s207, %s28
          %s210 = ssub.s32 16, 16
          %211 = vsyncadd %s201, %s210
          %s212 = smul.addr %s208, 16
          %s213 = scalar_lea.hbm %s3, %s212
          %s215 = sshll.u32 %s203, 4
          %s216 = int_to_ptr.vmem [resolvable:$true] %s215
          %218 = dma.vmem_to_hbm [thread:$0]  %s216, 16, %s213, %s201
        $region32: #{tpu_custom_call.1} parent=27 // pred_fallthru
          _
      $region28: #{tpu_custom_call.1} parent=5 // pred_fallthru
        _
      %p219 = scmp.le.s32.totalorder 2, %s18
      // Predicated region
      $region33: #{tpu_custom_call.1} parent=5 // pred_check
        %p220 = pneg %p219
      $region34: #{tpu_custom_call.1} parent=5 // pred_check_branch
        %222 = sbr.rel (%p220) target = $region36
      $region35: #{tpu_custom_call.1} parent=5 // pred_region
        %s223 = ssub.s32 %s18, 2
        // Predicated region
        $region37: #{tpu_custom_call.1} parent=35 // pred_check
          %p224 = pneg %p121
        $region38: #{tpu_custom_call.1} parent=35 // pred_check_branch
          %226 = sbr.rel (%p224) target = $region40
        $region39: #{tpu_custom_call.1} parent=35 // pred_region
          %s227 = sand.u32 %s106, 1
          %s228 = scalar_lea.sflag [#allocation5], %s227
          %s229 = sand.u32 %s106, 1
          %s230 = scalar_lea.vmem [#allocation4], %s229
          %231 = dma.done %s228, 16
        $region40: #{tpu_custom_call.1} parent=35 // pred_fallthru
          _
      $region36: #{tpu_custom_call.1} parent=5 // pred_fallthru
        _
    $region6: #{tpu_custom_call.1} parent=1 // loop_footer
      %s22 = sadd.s32 1, %s18
    $region7: #{tpu_custom_call.1} parent=1 // loop_footer_branch
      %17 = sbr.rel target = $region3
    $region8: #{tpu_custom_call.1} parent=1 // loop_exit
      _
    %232 = vsyncpa [#allocation5], 1
    %s233 = scalar_lea.sflag [#allocation5], 1
    %234 = vsyncpa %s233, 1

</llo_original>
